<compile_context>
chip_gen: v6e
topology: v6e:2x2x1
jax: 0.10.0
libtpu: 0.0.40
codegen_flags: <defaults>
</compile_context>

<pallas_src>
import functools

import jax
import jax.numpy as jnp
from jax import lax
from jax.experimental import pallas as pl
from jax.experimental.pallas import tpu as pltpu

_EPS = 1e-8  # torch.nn.CosineSimilarity default eps


def _ntxent_kernel(rep_ref, out_ref, *, inv_temp, n_chunks):
    """rep_ref: (4, D, CT) block — rep_ref[k, :, c] is row-k of chunk c (chunks on lanes).
    out_ref: (1, 1, 1) f32 per-partial resident accumulator (sum of per-row CEs)."""
    i = pl.program_id(1)

    @pl.when(i == 0)
    def _init():
        out_ref[...] = jnp.zeros_like(out_ref)

    ct = rep_ref.shape[2]

    # Raw (un-normalized) rows; DMA stays in the input dtype, compute in f32.
    a = rep_ref[0].astype(jnp.float32)            # (D, CT)
    b = rep_ref[1].astype(jnp.float32)
    c = rep_ref[2].astype(jnp.float32)
    d = rep_ref[3].astype(jnp.float32)

    def rowdot(u, v):
        # Sublane-axis reduction: mostly plain VALU cross-vreg adds, small XLU tail.
        return jnp.sum(u * v, axis=0, keepdims=True)          # (1, CT)

    # 4 squared norms + 6 cross dots (normalize-after-dot: no normalized copies).
    ss_a = rowdot(a, a)
    ss_b = rowdot(b, b)
    ss_c = rowdot(c, c)
    ss_d = rowdot(d, d)

    def sim(dot, ss_u, ss_v):
        # cosine = dot / max(||u||*||v||, eps), then / temperature; all on (1, CT).
        return dot * lax.rsqrt(jnp.maximum(ss_u * ss_v, _EPS * _EPS)) * inv_temp

    s_ab = sim(rowdot(a, b), ss_a, ss_b)
    s_ac = sim(rowdot(a, c), ss_a, ss_c)
    s_ad = sim(rowdot(a, d), ss_a, ss_d)
    s_bc = sim(rowdot(b, c), ss_b, ss_c)
    s_bd = sim(rowdot(b, d), ss_b, ss_d)
    s_cd = sim(rowdot(c, d), ss_c, ss_d)

    def ce(pos, n1, n2):
        # Cross entropy with label 0 over logits [pos, n1, n2]; lane-dense (1, CT).
        m = jnp.maximum(pos, jnp.maximum(n1, n2))
        lse = m + jnp.log(jnp.exp(pos - m) + jnp.exp(n1 - m) + jnp.exp(n2 - m))
        return lse - pos

    # Chunk rows = [a, b, c, d] = [zjs_even, zjs_odd, zis_even, zis_odd];
    # positives a<->c and b<->d; negatives = the other two in-chunk rows.
    ce_sum = (ce(s_ac, s_ab, s_ad)        # row a
              + ce(s_bd, s_ab, s_bc)      # row b
              + ce(s_ac, s_bc, s_cd)      # row c
              + ce(s_bd, s_ad, s_cd))     # row d            -> (1, CT)

    # Mask chunks beyond the real batch.  The wrapper pads C up to an exact multiple of
    # (n_partials * tiles_per_core * ct), so block origins are always exact; this mask is
    # lane-dense and negligible next to the (D, CT) work.
    gtile = pl.program_id(0) * pl.num_programs(1) + i
    cid = gtile * ct + lax.broadcasted_iota(jnp.int32, (1, ct), 1)
    ce_sum = jnp.where(cid < n_chunks, ce_sum, 0.0)

    out_ref[...] += jnp.sum(ce_sum, keepdims=True).reshape(1, 1, 1)


@functools.partial(jax.jit, static_argnames=("temperature",))
def conditional_ntxent_loss(zis, zjs, temperature=0.5):
    B, D = zis.shape
    assert B % 2 == 0, "batch must be divisible by the chunk size (2)"
    C = B // 2

    # Chunk-major, features-on-sublanes, chunks-on-lanes layout:
    # rep4[k, :, c] = row k of chunk c, rows = [zjs[2c], zjs[2c+1], zis[2c], zis[2c+1]].
    rep4 = jnp.stack(
        [zjs[0::2].T, zjs[1::2].T, zis[0::2].T, zis[1::2].T], axis=0)   # (4, D, C)

    itemsize = jnp.dtype(rep4.dtype).itemsize
    # Live bytes per chunk column: 4 groups x D x (double-buffered input + ~6 f32 temps).
    per_col = 4 * D * (2 * itemsize + 6 * 4)
    ct = ((18 * 1024 * 1024) // per_col) // 128 * 128
    ct = max(128, min(ct, 8192))
    c_pad128 = -(-C // 128) * 128
    ct = min(ct, c_pad128)                       # never bigger than the (padded) data

    n_tiles = -(-c_pad128 // ct)
    n_partials = 2 if n_tiles >= 2 else 1        # v7x megacore split; cheap on 1-TC chips
    tiles_per_core = -(-n_tiles // n_partials)
    c_padded = n_partials * tiles_per_core * ct
    if c_padded > C:
        rep4 = jnp.pad(rep4, ((0, 0), (0, 0), (0, c_padded - C)))

    out = pl.pallas_call(
        functools.partial(_ntxent_kernel,
                          inv_temp=1.0 / float(temperature),
                          n_chunks=C),
        out_shape=jax.ShapeDtypeStruct((n_partials, 1, 1), jnp.float32),
        grid=(n_partials, tiles_per_core),
        in_specs=[pl.BlockSpec(
            (4, D, ct),
            lambda p, i, tpc=tiles_per_core: (0, 0, p * tpc + i))],
        out_specs=pl.BlockSpec((1, 1, 1), lambda p, i: (p, 0, 0)),
        compiler_params=pltpu.CompilerParams(
            dimension_semantics=("parallel", "arbitrary"),
            # Safely below v7x's 64 MiB physical VMEM, above the 32 MiB scoped default;
            # tile sizing above keeps the live footprint ~<= 20 MiB.
            vmem_limit_bytes=40 * 1024 * 1024,
        ),
    )(rep4)

    # CrossEntropyLoss(reduction='sum') summed over chunks, divided by 2 * batch_size.
    return jnp.sum(out) / (2.0 * B)


def _reference(zis, zjs, temperature):
    """Pure-JAX mirror of the PyTorch forward loop (cosine path)."""
    B, _ = zis.shape
    loss = 0.0
    for c in range(B // 2):
        a = zjs[2 * c:2 * c + 2]
        b = zis[2 * c:2 * c + 2]
        rep = jnp.concatenate([a, b], axis=0)                       # (4, D)
        n = jnp.sqrt(jnp.sum(rep * rep, axis=-1))
        sim = (rep @ rep.T) / jnp.maximum(n[:, None] * n[None, :], _EPS)
        pos = jnp.array([sim[0, 2], sim[1, 3], sim[2, 0], sim[3, 1]])
        negs = jnp.array([[sim[0, 1], sim[0, 3]],
                          [sim[1, 0], sim[1, 2]],
                          [sim[2, 1], sim[2, 3]],
                          [sim[3, 0], sim[3, 2]]])
        logits = jnp.concatenate([pos[:, None], negs], axis=1) / temperature
        ce = jax.nn.logsumexp(logits, axis=-1) - logits[:, 0]
        loss = loss + jnp.sum(ce)
    return loss / (2.0 * B)


if __name__ == "__main__":
    key = jax.random.PRNGKey(0)
    k1, k2 = jax.random.split(key)
    B, D = 8, 32                       # 4 chunks of 2, hidden=32
    temperature = 0.5                  # module hyperparameters (no learnable weights)
    use_cosine_similarity = True

    zis = jax.random.normal(k1, (B, D), dtype=jnp.float32)
    zjs = jax.random.normal(k2, (B, D), dtype=jnp.float32)

    out = conditional_ntxent_loss(zis, zjs, temperature=temperature)
    out = jax.block_until_ready(out)

    ref = _reference(zis, zjs, temperature)
    assert jnp.allclose(out, ref, rtol=1e-5, atol=1e-5), (float(out), float(ref))
    print("KERNEL_OK")
</pallas_src>

<mosaic_0001>
module attributes {stable_mosaic.version = 11 : i64} {
  func.func @_ntxent_kernel(%arg0: i32, %arg1: i32, %arg2: memref<4x32x128xf32, #tpu.memory_space<vmem>>, %arg3: memref<1x1x1xf32, #tpu.memory_space<vmem>>) attributes {dimension_semantics = [#tpu.dimension_semantics<parallel>, #tpu.dimension_semantics<arbitrary>], iteration_bounds = array<i64: 1, 1>, scalar_prefetch = 0 : i64, scratch_operands = 0 : i64, tpu.core_type = #tpu.core_type<tc>, window_params = [{transform_indices = @transform_0, window_bounds = array<i64: 4, 32, 128>}, {transform_indices = @transform_1, window_bounds = array<i64: 1, 1, 1>}]} {
    %c0_i32 = arith.constant 0 : i32
    %0 = arith.cmpi eq, %arg1, %c0_i32 : i32
    %1 = arith.extui %0 : i1 to i32
    %c0_i32_0 = arith.constant 0 : i32
    %2 = arith.cmpi ne, %1, %c0_i32_0 : i32
    scf.if %2 {
      %cst_38 = arith.constant 0.000000e+00 : f32
      %157 = vector.broadcast %cst_38 : f32 to vector<1x1x1xf32>
      %c0_39 = arith.constant 0 : index
      %c0_40 = arith.constant 0 : index
      %c0_41 = arith.constant 0 : index
      %158 = vector.load %arg3[%c0_39, %c0_40, %c0_41] : memref<1x1x1xf32, #tpu.memory_space<vmem>>, vector<1x1x1xf32>
      tpu.vector_store %arg3[%c0_39, %c0_40, %c0_41], %157 {strides = array<i32>} : memref<1x1x1xf32, #tpu.memory_space<vmem>>, vector<1x1x1xf32>,
    } else {
    }
    %c0 = arith.constant 0 : index
    %c0_1 = arith.constant 0 : index
    %c0_2 = arith.constant 0 : index
    %3 = vector.load %arg2[%c0, %c0_1, %c0_2] : memref<4x32x128xf32, #tpu.memory_space<vmem>>, vector<1x32x128xf32>
    %4 = vector.shape_cast %3 : vector<1x32x128xf32> to vector<32x128xf32>
    %c1 = arith.constant 1 : index
    %c0_3 = arith.constant 0 : index
    %c0_4 = arith.constant 0 : index
    %5 = vector.load %arg2[%c1, %c0_3, %c0_4] : memref<4x32x128xf32, #tpu.memory_space<vmem>>, vector<1x32x128xf32>
    %6 = vector.shape_cast %5 : vector<1x32x128xf32> to vector<32x128xf32>
    %c2 = arith.constant 2 : index
    %c0_5 = arith.constant 0 : index
    %c0_6 = arith.constant 0 : index
    %7 = vector.load %arg2[%c2, %c0_5, %c0_6] : memref<4x32x128xf32, #tpu.memory_space<vmem>>, vector<1x32x128xf32>
    %8 = vector.shape_cast %7 : vector<1x32x128xf32> to vector<32x128xf32>
    %c3 = arith.constant 3 : index
    %c0_7 = arith.constant 0 : index
    %c0_8 = arith.constant 0 : index
    %9 = vector.load %arg2[%c3, %c0_7, %c0_8] : memref<4x32x128xf32, #tpu.memory_space<vmem>>, vector<1x32x128xf32>
    %10 = vector.shape_cast %9 : vector<1x32x128xf32> to vector<32x128xf32>
    %11 = arith.mulf %4, %4 : vector<32x128xf32>
    %cst = arith.constant dense<0.000000e+00> : vector<128xf32>
    %12 = vector.multi_reduction <add>, %11, %cst [0] : vector<32x128xf32> to vector<128xf32>
    %13 = vector.shape_cast %12 : vector<128xf32> to vector<1x128xf32>
    %14 = arith.mulf %6, %6 : vector<32x128xf32>
    %cst_9 = arith.constant dense<0.000000e+00> : vector<128xf32>
    %15 = vector.multi_reduction <add>, %14, %cst_9 [0] : vector<32x128xf32> to vector<128xf32>
    %16 = vector.shape_cast %15 : vector<128xf32> to vector<1x128xf32>
    %17 = arith.mulf %8, %8 : vector<32x128xf32>
    %cst_10 = arith.constant dense<0.000000e+00> : vector<128xf32>
    %18 = vector.multi_reduction <add>, %17, %cst_10 [0] : vector<32x128xf32> to vector<128xf32>
    %19 = vector.shape_cast %18 : vector<128xf32> to vector<1x128xf32>
    %20 = arith.mulf %10, %10 : vector<32x128xf32>
    %cst_11 = arith.constant dense<0.000000e+00> : vector<128xf32>
    %21 = vector.multi_reduction <add>, %20, %cst_11 [0] : vector<32x128xf32> to vector<128xf32>
    %22 = vector.shape_cast %21 : vector<128xf32> to vector<1x128xf32>
    %23 = arith.mulf %4, %6 : vector<32x128xf32>
    %cst_12 = arith.constant dense<0.000000e+00> : vector<128xf32>
    %24 = vector.multi_reduction <add>, %23, %cst_12 [0] : vector<32x128xf32> to vector<128xf32>
    %25 = vector.shape_cast %24 : vector<128xf32> to vector<1x128xf32>
    %26 = arith.mulf %13, %16 : vector<1x128xf32>
    %cst_13 = arith.constant 1.000000e-16 : f32
    %27 = vector.broadcast %cst_13 : f32 to vector<1x128xf32>
    %28 = arith.maximumf %26, %27 : vector<1x128xf32>
    %29 = math.rsqrt %28 : vector<1x128xf32>
    %30 = arith.mulf %25, %29 : vector<1x128xf32>
    %cst_14 = arith.constant 2.000000e+00 : f32
    %31 = vector.broadcast %cst_14 : f32 to vector<1x128xf32>
    %32 = arith.mulf %30, %31 : vector<1x128xf32>
    %33 = arith.mulf %4, %8 : vector<32x128xf32>
    %cst_15 = arith.constant dense<0.000000e+00> : vector<128xf32>
    %34 = vector.multi_reduction <add>, %33, %cst_15 [0] : vector<32x128xf32> to vector<128xf32>
    %35 = vector.shape_cast %34 : vector<128xf32> to vector<1x128xf32>
    %36 = arith.mulf %13, %19 : vector<1x128xf32>
    %cst_16 = arith.constant 1.000000e-16 : f32
    %37 = vector.broadcast %cst_16 : f32 to vector<1x128xf32>
    %38 = arith.maximumf %36, %37 : vector<1x128xf32>
    %39 = math.rsqrt %38 : vector<1x128xf32>
    %40 = arith.mulf %35, %39 : vector<1x128xf32>
    %cst_17 = arith.constant 2.000000e+00 : f32
    %41 = vector.broadcast %cst_17 : f32 to vector<1x128xf32>
    %42 = arith.mulf %40, %41 : vector<1x128xf32>
    %43 = arith.mulf %4, %10 : vector<32x128xf32>
    %cst_18 = arith.constant dense<0.000000e+00> : vector<128xf32>
    %44 = vector.multi_reduction <add>, %43, %cst_18 [0] : vector<32x128xf32> to vector<128xf32>
    %45 = vector.shape_cast %44 : vector<128xf32> to vector<1x128xf32>
    %46 = arith.mulf %13, %22 : vector<1x128xf32>
    %cst_19 = arith.constant 1.000000e-16 : f32
    %47 = vector.broadcast %cst_19 : f32 to vector<1x128xf32>
    %48 = arith.maximumf %46, %47 : vector<1x128xf32>
    %49 = math.rsqrt %48 : vector<1x128xf32>
    %50 = arith.mulf %45, %49 : vector<1x128xf32>
    %cst_20 = arith.constant 2.000000e+00 : f32
    %51 = vector.broadcast %cst_20 : f32 to vector<1x128xf32>
    %52 = arith.mulf %50, %51 : vector<1x128xf32>
    %53 = arith.mulf %6, %8 : vector<32x128xf32>
    %cst_21 = arith.constant dense<0.000000e+00> : vector<128xf32>
    %54 = vector.multi_reduction <add>, %53, %cst_21 [0] : vector<32x128xf32> to vector<128xf32>
    %55 = vector.shape_cast %54 : vector<128xf32> to vector<1x128xf32>
    %56 = arith.mulf %16, %19 : vector<1x128xf32>
    %cst_22 = arith.constant 1.000000e-16 : f32
    %57 = vector.broadcast %cst_22 : f32 to vector<1x128xf32>
    %58 = arith.maximumf %56, %57 : vector<1x128xf32>
    %59 = math.rsqrt %58 : vector<1x128xf32>
    %60 = arith.mulf %55, %59 : vector<1x128xf32>
    %cst_23 = arith.constant 2.000000e+00 : f32
    %61 = vector.broadcast %cst_23 : f32 to vector<1x128xf32>
    %62 = arith.mulf %60, %61 : vector<1x128xf32>
    %63 = arith.mulf %6, %10 : vector<32x128xf32>
    %cst_24 = arith.constant dense<0.000000e+00> : vector<128xf32>
    %64 = vector.multi_reduction <add>, %63, %cst_24 [0] : vector<32x128xf32> to vector<128xf32>
    %65 = vector.shape_cast %64 : vector<128xf32> to vector<1x128xf32>
    %66 = arith.mulf %16, %22 : vector<1x128xf32>
    %cst_25 = arith.constant 1.000000e-16 : f32
    %67 = vector.broadcast %cst_25 : f32 to vector<1x128xf32>
    %68 = arith.maximumf %66, %67 : vector<1x128xf32>
    %69 = math.rsqrt %68 : vector<1x128xf32>
    %70 = arith.mulf %65, %69 : vector<1x128xf32>
    %cst_26 = arith.constant 2.000000e+00 : f32
    %71 = vector.broadcast %cst_26 : f32 to vector<1x128xf32>
    %72 = arith.mulf %70, %71 : vector<1x128xf32>
    %73 = arith.mulf %8, %10 : vector<32x128xf32>
    %cst_27 = arith.constant dense<0.000000e+00> : vector<128xf32>
    %74 = vector.multi_reduction <add>, %73, %cst_27 [0] : vector<32x128xf32> to vector<128xf32>
    %75 = vector.shape_cast %74 : vector<128xf32> to vector<1x128xf32>
    %76 = arith.mulf %19, %22 : vector<1x128xf32>
    %cst_28 = arith.constant 1.000000e-16 : f32
    %77 = vector.broadcast %cst_28 : f32 to vector<1x128xf32>
    %78 = arith.maximumf %76, %77 : vector<1x128xf32>
    %79 = math.rsqrt %78 : vector<1x128xf32>
    %80 = arith.mulf %75, %79 : vector<1x128xf32>
    %cst_29 = arith.constant 2.000000e+00 : f32
    %81 = vector.broadcast %cst_29 : f32 to vector<1x128xf32>
    %82 = arith.mulf %80, %81 : vector<1x128xf32>
    %83 = arith.maximumf %32, %52 : vector<1x128xf32>
    %84 = arith.maximumf %42, %83 : vector<1x128xf32>
    %85 = arith.subf %42, %84 : vector<1x128xf32>
    %86 = math.exp %85 : vector<1x128xf32>
    %87 = arith.subf %32, %84 : vector<1x128xf32>
    %88 = math.exp %87 : vector<1x128xf32>
    %89 = arith.addf %86, %88 : vector<1x128xf32>
    %90 = arith.subf %52, %84 : vector<1x128xf32>
    %91 = math.exp %90 : vector<1x128xf32>
    %92 = arith.addf %89, %91 : vector<1x128xf32>
    %93 = math.log %92 : vector<1x128xf32>
    %94 = arith.addf %84, %93 : vector<1x128xf32>
    %95 = arith.subf %94, %42 : vector<1x128xf32>
    %96 = arith.maximumf %32, %62 : vector<1x128xf32>
    %97 = arith.maximumf %72, %96 : vector<1x128xf32>
    %98 = arith.subf %72, %97 : vector<1x128xf32>
    %99 = math.exp %98 : vector<1x128xf32>
    %100 = arith.subf %32, %97 : vector<1x128xf32>
    %101 = math.exp %100 : vector<1x128xf32>
    %102 = arith.addf %99, %101 : vector<1x128xf32>
    %103 = arith.subf %62, %97 : vector<1x128xf32>
    %104 = math.exp %103 : vector<1x128xf32>
    %105 = arith.addf %102, %104 : vector<1x128xf32>
    %106 = math.log %105 : vector<1x128xf32>
    %107 = arith.addf %97, %106 : vector<1x128xf32>
    %108 = arith.subf %107, %72 : vector<1x128xf32>
    %109 = arith.addf %95, %108 : vector<1x128xf32>
    %110 = arith.maximumf %62, %82 : vector<1x128xf32>
    %111 = arith.maximumf %42, %110 : vector<1x128xf32>
    %112 = arith.subf %42, %111 : vector<1x128xf32>
    %113 = math.exp %112 : vector<1x128xf32>
    %114 = arith.subf %62, %111 : vector<1x128xf32>
    %115 = math.exp %114 : vector<1x128xf32>
    %116 = arith.addf %113, %115 : vector<1x128xf32>
    %117 = arith.subf %82, %111 : vector<1x128xf32>
    %118 = math.exp %117 : vector<1x128xf32>
    %119 = arith.addf %116, %118 : vector<1x128xf32>
    %120 = math.log %119 : vector<1x128xf32>
    %121 = arith.addf %111, %120 : vector<1x128xf32>
    %122 = arith.subf %121, %42 : vector<1x128xf32>
    %123 = arith.addf %109, %122 : vector<1x128xf32>
    %124 = arith.maximumf %52, %82 : vector<1x128xf32>
    %125 = arith.maximumf %72, %124 : vector<1x128xf32>
    %126 = arith.subf %72, %125 : vector<1x128xf32>
    %127 = math.exp %126 : vector<1x128xf32>
    %128 = arith.subf %52, %125 : vector<1x128xf32>
    %129 = math.exp %128 : vector<1x128xf32>
    %130 = arith.addf %127, %129 : vector<1x128xf32>
    %131 = arith.subf %82, %125 : vector<1x128xf32>
    %132 = math.exp %131 : vector<1x128xf32>
    %133 = arith.addf %130, %132 : vector<1x128xf32>
    %134 = math.log %133 : vector<1x128xf32>
    %135 = arith.addf %125, %134 : vector<1x128xf32>
    %136 = arith.subf %135, %72 : vector<1x128xf32>
    %137 = arith.addf %123, %136 : vector<1x128xf32>
    %c1_i32 = arith.constant 1 : i32
    %138 = arith.muli %arg0, %c1_i32 : i32
    %139 = arith.addi %138, %arg1 : i32
    %c128_i32 = arith.constant 128 : i32
    %140 = arith.muli %139, %c128_i32 : i32
    %141 = tpu.iota {dimensions = array<i32: 1>} : vector<1x128xi32>
    %142 = vector.broadcast %140 : i32 to vector<1x128xi32>
    %143 = arith.addi %142, %141 : vector<1x128xi32>
    %c4_i32 = arith.constant 4 : i32
    %144 = vector.broadcast %c4_i32 : i32 to vector<1x128xi32>
    %145 = arith.cmpi slt, %143, %144 : vector<1x128xi32>
    %cst_30 = arith.constant 0.000000e+00 : f32
    %146 = vector.broadcast %cst_30 : f32 to vector<1x128xf32>
    %147 = arith.select %145, %137, %146 : vector<1x128xi1>, vector<1x128xf32>
    %c0_31 = arith.constant 0 : index
    %c0_32 = arith.constant 0 : index
    %c0_33 = arith.constant 0 : index
    %148 = vector.load %arg3[%c0_31, %c0_32, %c0_33] : memref<1x1x1xf32, #tpu.memory_space<vmem>>, vector<1x1x1xf32>
    %149 = vector.shape_cast %147 : vector<1x128xf32> to vector<1x1x128xf32>
    %cst_34 = arith.constant dense<0.000000e+00> : vector<1xf32>
    %150 = vector.multi_reduction <add>, %149, %cst_34 [1, 2] : vector<1x1x128xf32> to vector<1xf32>
    %151 = vector.shape_cast %150 : vector<1xf32> to vector<1x1x1xf32>
    %152 = vector.extract %151[0, 0, 0] : f32 from vector<1x1x1xf32>
    %153 = vector.broadcast %152 : f32 to vector<1x1xf32>
    %154 = vector.shape_cast %153 : vector<1x1xf32> to vector<1x1x1xf32>
    %155 = arith.addf %148, %154 : vector<1x1x1xf32>
    %c0_35 = arith.constant 0 : index
    %c0_36 = arith.constant 0 : index
    %c0_37 = arith.constant 0 : index
    %156 = vector.load %arg3[%c0_35, %c0_36, %c0_37] : memref<1x1x1xf32, #tpu.memory_space<vmem>>, vector<1x1x1xf32>
    tpu.vector_store %arg3[%c0_35, %c0_36, %c0_37], %155 {strides = array<i32>} : memref<1x1x1xf32, #tpu.memory_space<vmem>>, vector<1x1x1xf32>,
    return
  }
  func.func @transform_0(%arg0: i32, %arg1: i32) -> (i32, i32, i32) {
    %c1_i32 = arith.constant 1 : i32
    %0 = arith.muli %arg0, %c1_i32 : i32
    %1 = arith.addi %0, %arg1 : i32
    %c0_i32 = arith.constant 0 : i32
    %c0_i32_0 = arith.constant 0 : i32
    %c0_i32_1 = arith.constant 0 : i32
    return %c0_i32, %c0_i32_0, %1 : i32, i32, i32
  }
  func.func @transform_1(%arg0: i32, %arg1: i32) -> (i32, i32, i32) {
    %c0_i32 = arith.constant 0 : i32
    %c0_i32_0 = arith.constant 0 : i32
    %c0_i32_1 = arith.constant 0 : i32
    return %arg0, %c0_i32, %c0_i32_0 : i32, i32, i32
  }
}

</mosaic_0001>

<llo_original>
// kernel: conditional_ntxent_loss.1
$region0: #{conditional_ntxent_loss.1}
  #allocation0 [shape = 'u32[]', space=smem, size = 0x4, offset = 0x4, fixed_abs, tag = 'smem constant byte address 0x4 - core index']
  #allocation1 [shape = 'u32[144,128]{1,0:T(1,128)}', space=vmem, size = 0x12000, scoped, tag = 'internal scratch']
  %s0 = inlined_call_operand.vmem [shape: f32[4,32,128], index: 0, kind: input, shape index: {}]
  %s1 = inlined_call_operand.hbm [shape: f32[1,1,1], index: 1, kind: output, shape index: {}]
  %s2 = sld [smem:[#allocation0]]
  $region18: #{conditional_ntxent_loss.1} parent=0
    _
  %s4 = ssub.s32 1, %s2
  %s5 = scalar_select 0, %s4, %s2
  $region1: #{conditional_ntxent_loss.1} parent=0
    #allocation2 [shape = 'u8[512]{0}', space=vmem, size = 0x400, scoped, tag = 'output window, operand 0, single buffered']
    #allocation3 [shape = 's32[1]{0}', space=sflag, size = 0x4, scoped, tag = 'scoped memory for conditional_ntxent_loss.1']
    %6 = vsyncpa [#allocation3], 0
    // Predicated region
    $region2: #{conditional_ntxent_loss.1} parent=1 // pred_check
      _
    $region3: #{conditional_ntxent_loss.1} parent=1 // pred_check_branch
      %8 = sbr.rel (0) target = $region5
    $region4: #{conditional_ntxent_loss.1} parent=1 // pred_region
      %s9 = sadd.s32 0, 0
      %p10 = scmp.lt.s32.totalorder %s9, 0
      %s11 = scalar_select %p10, %s9, 0
      %s12 = smul.addr %s11, 8
      %s13 = scalar_lea.vmem %s0, %s12
      %s14 = sadd.s32 0, 0
    $region5: #{conditional_ntxent_loss.1} parent=1 // pred_fallthru
      _
    %s15 = sadd.s32 0, 0
    %p16 = scmp.lt.s32.totalorder %s15, 0
    %s17 = scalar_select %p16, %s15, 0
    %s18 = smul.addr %s17, 8
    %s19 = scalar_lea.vmem %s0, %s18
    %s20 = sadd.s32 0, 0
    %p21 = scmp.lt.s32.totalorder %s20, 0
    %s22 = scalar_select %p21, %s20, 0
    %s23 = smul.addr %s22, 8
    %s24 = scalar_lea.vmem %s0, %s23
    %s25 = sadd.s32 0, 0
    %p26 = scmp.eq.s32.totalorder 0, 0
    // Predicated region
    $region6: #{conditional_ntxent_loss.1} parent=1 // pred_check
      %p27 = pneg %p26
    $region7: #{conditional_ntxent_loss.1} parent=1 // pred_check_branch
      %29 = sbr.rel (%p27) target = $region9
    $region8: #{conditional_ntxent_loss.1} parent=1 // pred_region
      %vm30 = vcmask 0
      %31 = vst.msk [vmem:[#allocation2] sm:$0x1] %vm30, 0.0
    $region9: #{conditional_ntxent_loss.1} parent=1 // pred_fallthru
      _
    %v32 = vld [vmem:[%s24] sm:$0xff]
    %v33 = vld [vmem:[%s24 + $0x8] sm:$0xff]
    %v34 = vld [vmem:[%s24 + $0x10] sm:$0xff]
    %v35 = vld [vmem:[%s24 + $0x18] sm:$0xff]
    %s36 = scalar_lea.vmem %s24, 32
    %v37 = vld [vmem:[%s36] sm:$0xff]
    %v38 = vld [vmem:[%s36 + $0x8] sm:$0xff]
    %v39 = vld [vmem:[%s36 + $0x10] sm:$0xff]
    %v40 = vld [vmem:[%s36 + $0x18] sm:$0xff]
    %s41 = scalar_lea.vmem %s24, 64
    %v42 = vld [vmem:[%s41] sm:$0xff]
    %v43 = vld [vmem:[%s41 + $0x8] sm:$0xff]
    %v44 = vld [vmem:[%s41 + $0x10] sm:$0xff]
    %v45 = vld [vmem:[%s41 + $0x18] sm:$0xff]
    %s46 = scalar_lea.vmem %s24, 96
    %v47 = vld [vmem:[%s46] sm:$0xff]
    %v48 = vld [vmem:[%s46 + $0x8] sm:$0xff]
    %v49 = vld [vmem:[%s46 + $0x10] sm:$0xff]
    %v50 = vld [vmem:[%s46 + $0x18] sm:$0xff]
    %v51 = vmul.f32 %v32, %v32
    %v52 = vmul.f32 %v33, %v33
    %v53 = vmul.f32 %v34, %v34
    %v54 = vmul.f32 %v35, %v35
    %v55 = vadd.f32 %v51, %v52
    %v56 = vadd.f32 %v55, %v53
    %v57 = vadd.f32 %v56, %v54
    %v58 = vrot.slane %v57, 4
    %v59 = vadd.f32 %v57, %v58
    %v60 = vrot.slane %v59, 2
    %v61 = vadd.f32 %v59, %v60
    %v62 = vrot.slane %v61, 1
    %v63 = vadd.f32 %v61, %v62
    %v64 = vmul.f32 %v37, %v37
    %v65 = vmul.f32 %v38, %v38
    %v66 = vmul.f32 %v39, %v39
    %v67 = vmul.f32 %v40, %v40
    %v68 = vadd.f32 %v64, %v65
    %v69 = vadd.f32 %v68, %v66
    %v70 = vadd.f32 %v69, %v67
    %v71 = vrot.slane %v70, 4
    %v72 = vadd.f32 %v70, %v71
    %v73 = vrot.slane %v72, 2
    %v74 = vadd.f32 %v72, %v73
    %v75 = vrot.slane %v74, 1
    %v76 = vadd.f32 %v74, %v75
    %v77 = vmul.f32 %v42, %v42
    %v78 = vmul.f32 %v43, %v43
    %v79 = vmul.f32 %v44, %v44
    %v80 = vmul.f32 %v45, %v45
    %v81 = vadd.f32 %v77, %v78
    %v82 = vadd.f32 %v81, %v79
    %v83 = vadd.f32 %v82, %v80
    %v84 = vrot.slane %v83, 4
    %v85 = vadd.f32 %v83, %v84
    %v86 = vrot.slane %v85, 2
    %v87 = vadd.f32 %v85, %v86
    %v88 = vrot.slane %v87, 1
    %v89 = vadd.f32 %v87, %v88
    %v90 = vmul.f32 %v47, %v47
    %v91 = vmul.f32 %v48, %v48
    %v92 = vmul.f32 %v49, %v49
    %v93 = vmul.f32 %v50, %v50
    %v94 = vadd.f32 %v90, %v91
    %v95 = vadd.f32 %v94, %v92
    %v96 = vadd.f32 %v95, %v93
    %v97 = vrot.slane %v96, 4
    %v98 = vadd.f32 %v96, %v97
    %v99 = vrot.slane %v98, 2
    %v100 = vadd.f32 %v98, %v99
    %v101 = vrot.slane %v100, 1
    %v102 = vadd.f32 %v100, %v101
    %v103 = vmul.f32 %v32, %v37
    %v104 = vmul.f32 %v33, %v38
    %v105 = vmul.f32 %v34, %v39
    %v106 = vmul.f32 %v35, %v40
    %v107 = vadd.f32 %v103, %v104
    %v108 = vadd.f32 %v107, %v105
    %v109 = vadd.f32 %v108, %v106
    %v110 = vrot.slane %v109, 4
    %v111 = vadd.f32 %v109, %v110
    %v112 = vrot.slane %v111, 2
    %v113 = vadd.f32 %v111, %v112
    %v114 = vrot.slane %v113, 1
    %v115 = vadd.f32 %v113, %v114
    %v116 = vmul.f32 %v63, %v76
    %v117 = vmax.f32 %v116, 1e-16
    %v118 = vrsqrt.pop %v117
    %v119 = vmul.f32 %v115, %v118
    %v120 = vmul.f32 %v119, 2.0
    %v121 = vmul.f32 %v32, %v42
    %v122 = vmul.f32 %v33, %v43
    %v123 = vmul.f32 %v34, %v44
    %v124 = vmul.f32 %v35, %v45
    %v125 = vadd.f32 %v121, %v122
    %v126 = vadd.f32 %v125, %v123
    %v127 = vadd.f32 %v126, %v124
    %v128 = vrot.slane %v127, 4
    %v129 = vadd.f32 %v127, %v128
    %v130 = vrot.slane %v129, 2
    %v131 = vadd.f32 %v129, %v130
    %v132 = vrot.slane %v131, 1
    %v133 = vadd.f32 %v131, %v132
    %v134 = vmul.f32 %v63, %v89
    %v135 = vmax.f32 %v134, 1e-16
    %v136 = vrsqrt.pop %v135
    %v137 = vmul.f32 %v133, %v136
    %v138 = vmul.f32 %v137, 2.0
    %v139 = vmul.f32 %v32, %v47
    %v140 = vmul.f32 %v33, %v48
    %v141 = vmul.f32 %v34, %v49
    %v142 = vmul.f32 %v35, %v50
    %v143 = vadd.f32 %v139, %v140
    %v144 = vadd.f32 %v143, %v141
    %v145 = vadd.f32 %v144, %v142
    %v146 = vrot.slane %v145, 4
    %v147 = vadd.f32 %v145, %v146
    %v148 = vrot.slane %v147, 2
    %v149 = vadd.f32 %v147, %v148
    %v150 = vrot.slane %v149, 1
    %v151 = vadd.f32 %v149, %v150
    %v152 = vmul.f32 %v63, %v102
    %v153 = vmax.f32 %v152, 1e-16
    %v154 = vrsqrt.pop %v153
    %v155 = vmul.f32 %v151, %v154
    %v156 = vmul.f32 %v155, 2.0
    %v157 = vmul.f32 %v37, %v42
    %v158 = vmul.f32 %v38, %v43
    %v159 = vmul.f32 %v39, %v44
    %v160 = vmul.f32 %v40, %v45
    %v161 = vadd.f32 %v157, %v158
    %v162 = vadd.f32 %v161, %v159
    %v163 = vadd.f32 %v162, %v160
    %v164 = vrot.slane %v163, 4
    %v165 = vadd.f32 %v163, %v164
    %v166 = vrot.slane %v165, 2
    %v167 = vadd.f32 %v165, %v166
    %v168 = vrot.slane %v167, 1
    %v169 = vadd.f32 %v167, %v168
    %v170 = vmul.f32 %v76, %v89
    %v171 = vmax.f32 %v170, 1e-16
    %v172 = vrsqrt.pop %v171
    %v173 = vmul.f32 %v169, %v172
    %v174 = vmul.f32 %v173, 2.0
    %v175 = vmul.f32 %v37, %v47
    %v176 = vmul.f32 %v38, %v48
    %v177 = vmul.f32 %v39, %v49
    %v178 = vmul.f32 %v40, %v50
    %v179 = vadd.f32 %v175, %v176
    %v180 = vadd.f32 %v179, %v177
    %v181 = vadd.f32 %v180, %v178
    %v182 = vrot.slane %v181, 4
    %v183 = vadd.f32 %v181, %v182
    %v184 = vrot.slane %v183, 2
    %v185 = vadd.f32 %v183, %v184
    %v186 = vrot.slane %v185, 1
    %v187 = vadd.f32 %v185, %v186
    %v188 = vmul.f32 %v76, %v102
    %v189 = vmax.f32 %v188, 1e-16
    %v190 = vrsqrt.pop %v189
    %v191 = vmul.f32 %v187, %v190
    %v192 = vmul.f32 %v191, 2.0
    %v193 = vmul.f32 %v42, %v47
    %v194 = vmul.f32 %v43, %v48
    %v195 = vmul.f32 %v44, %v49
    %v196 = vmul.f32 %v45, %v50
    %v197 = vadd.f32 %v193, %v194
    %v198 = vadd.f32 %v197, %v195
    %v199 = vadd.f32 %v198, %v196
    %v200 = vrot.slane %v199, 4
    %v201 = vadd.f32 %v199, %v200
    %v202 = vrot.slane %v201, 2
    %v203 = vadd.f32 %v201, %v202
    %v204 = vrot.slane %v203, 1
    %v205 = vadd.f32 %v203, %v204
    %v206 = vmul.f32 %v89, %v102
    %v207 = vmax.f32 %v206, 1e-16
    %v208 = vrsqrt.pop %v207
    %v209 = vmul.f32 %v205, %v208
    %v210 = vmul.f32 %v209, 2.0
    %v211 = vmax.f32 %v120, %v156
    %v212 = vmax.f32 %v138, %v211
    %v213 = vsub.f32 %v138, %v212
    %v214 = vmul.f32 %v213, 1.442695
    %v215 = vpow.pop %v214
    %v216 = vsub.f32 %v120, %v212
    %v217 = vmul.f32 %v216, 1.442695
    %v218 = vpow.pop %v217
    %v219 = vadd.f32 %v215, %v218
    %v220 = vsub.f32 %v156, %v212
    %v221 = vmul.f32 %v220, 1.442695
    %v222 = vpow.pop %v221
    %v223 = vadd.f32 %v219, %v222
    %v224 = vlog2.pop %v223
    %v225 = vmul.f32 %v224, 0.6931472
    %v226 = vadd.f32 %v212, %v225
    %v227 = vsub.f32 %v226, %v138
    %v228 = vmax.f32 %v120, %v174
    %v229 = vmax.f32 %v192, %v228
    %v230 = vsub.f32 %v192, %v229
    %v231 = vmul.f32 %v230, 1.442695
    %v232 = vpow.pop %v231
    %v233 = vsub.f32 %v120, %v229
    %v234 = vmul.f32 %v233, 1.442695
    %v235 = vpow.pop %v234
    %v236 = vadd.f32 %v232, %v235
    %v237 = vsub.f32 %v174, %v229
    %v238 = vmul.f32 %v237, 1.442695
    %v239 = vpow.pop %v238
    %v240 = vadd.f32 %v236, %v239
    %v241 = vlog2.pop %v240
    %v242 = vmul.f32 %v241, 0.6931472
    %v243 = vadd.f32 %v229, %v242
    %v244 = vsub.f32 %v243, %v192
    %v245 = vadd.f32 %v227, %v244
    %v246 = vmax.f32 %v174, %v210
    %v247 = vmax.f32 %v138, %v246
    %v248 = vsub.f32 %v138, %v247
    %v249 = vmul.f32 %v248, 1.442695
    %v250 = vpow.pop %v249
    %v251 = vsub.f32 %v174, %v247
    %v252 = vmul.f32 %v251, 1.442695
    %v253 = vpow.pop %v252
    %v254 = vadd.f32 %v250, %v253
    %v255 = vsub.f32 %v210, %v247
    %v256 = vmul.f32 %v255, 1.442695
    %v257 = vpow.pop %v256
    %v258 = vadd.f32 %v254, %v257
    %v259 = vlog2.pop %v258
    %v260 = vmul.f32 %v259, 0.6931472
    %v261 = vadd.f32 %v247, %v260
    %v262 = vsub.f32 %v261, %v138
    %v263 = vadd.f32 %v245, %v262
    %v264 = vmax.f32 %v156, %v210
    %v265 = vmax.f32 %v192, %v264
    %v266 = vsub.f32 %v192, %v265
    %v267 = vmul.f32 %v266, 1.442695
    %v268 = vpow.pop %v267
    %v269 = vsub.f32 %v156, %v265
    %v270 = vmul.f32 %v269, 1.442695
    %v271 = vpow.pop %v270
    %v272 = vadd.f32 %v268, %v271
    %v273 = vsub.f32 %v210, %v265
    %v274 = vmul.f32 %v273, 1.442695
    %v275 = vpow.pop %v274
    %v276 = vadd.f32 %v272, %v275
    %v277 = vlog2.pop %v276
    %v278 = vmul.f32 %v277, 0.6931472
    %v279 = vadd.f32 %v265, %v278
    %v280 = vsub.f32 %v279, %v192
    %v281 = vadd.f32 %v263, %v280
    %s282 = sadd.s32 0, 0
    %s283 = smul.u32 %s282, 128
    %v284 = vlaneseq
    %v285 = vand.u32 %v284, 127
    %v286 = vstv %s283
    %v287 = vadd.s32 %v286, %v285
    %vm288 = vcmp.lt.s32.totalorder %v287, 4
    %v289 = vsel %vm288, %v281, 0.0
    %v290 = vld [vmem:[#allocation2] sm:$0x1]
    %vm291 = vcmask 1040384
    %v292 = vsel %vm291, %v289, 0.0
    %293 = vadd.xlane.f32.xlu0 %v292
    %v294 = vpop.xlane.xlu0 %293
    %v295 = vrot.slane %v294, 4
    %v296 = vadd.f32 %v294, %v295
    %v297 = vrot.slane %v296, 2
    %v298 = vadd.f32 %v296, %v297
    %v299 = vrot.slane %v298, 1
    %v300 = vadd.f32 %v298, %v299
    %s301 = vtos %v300
    %v302 = vstv %s301
    %v303 = vadd.f32 %v290, %v302
    %vm304 = vcmask 0
    %305 = vst.msk [vmem:[#allocation2] sm:$0x1] %vm304, %v303
    // Predicated region
    $region10: #{conditional_ntxent_loss.1} parent=1 // pred_check
      _
    $region11: #{conditional_ntxent_loss.1} parent=1 // pred_check_branch
      %307 = sbr.rel (0) target = $region13
    $region12: #{conditional_ntxent_loss.1} parent=1 // pred_region
      %s309 = ssub.s32 16, 16
      %310 = vsyncadd [#allocation3], %s309
      %s312 = sshll.u32 [#allocation2], 4
      %s313 = int_to_ptr.vmem [resolvable:$true] %s312
      %315 = dma.vmem_to_hbm [thread:$0]  %s313, 16, %s1, [#allocation3]
    $region13: #{conditional_ntxent_loss.1} parent=1 // pred_fallthru
      _
    // Predicated region
    $region14: #{conditional_ntxent_loss.1} parent=1 // pred_check
      _
    $region15: #{conditional_ntxent_loss.1} parent=1 // pred_check_branch
      %317 = sbr.rel (0) target = $region17
    $region16: #{conditional_ntxent_loss.1} parent=1 // pred_region
      %318 = dma.done [#allocation3], 16
    $region17: #{conditional_ntxent_loss.1} parent=1 // pred_fallthru
      _
    %319 = vsyncpa [#allocation3], 1

</llo_original>
